<compile_context>
chip_gen: v6e
topology: v6e:2x2x1
jax: 0.10.0
libtpu: 0.0.40
codegen_flags: <defaults>
</compile_context>

<pallas_src>
import functools

import jax
import jax.numpy as jnp
from jax.experimental import pallas as pl
from jax.experimental.pallas import tpu as pltpu


# ----------------------------------------------------------------------------
# Pallas kernel: one edge tile per grid step, agg accumulated in VMEM scratch.
# ----------------------------------------------------------------------------
def _equiv_update_kernel(tanh, coords_range, norm_factor, agg_method,
                         x1_ref,      # [TE, H]  f32  layer-1 pre-activation
                         cdiff_ref,   # [3, TE]  f32  coord_diff (lane-dense)
                         emask_ref,   # [TE, 1]  f32  edge mask
                         row_ref,     # [TE, 1]  i32  segment ids (N = padded)
                         coord_ref,   # [3, N]   f32
                         nmask_ref,   # [1, N]   f32
                         w2_ref,      # [H, H]   f32
                         b2_ref,      # [1, H]   f32
                         w3_ref,      # [1, H]   f32
                         out_ref,     # [3, N]   f32
                         agg_sc,      # [3, N]   f32  VMEM scratch
                         cnt_sc):     # [1, N]   f32  VMEM scratch
    k = pl.program_id(0)

    @pl.when(k == 0)
    def _init():
        agg_sc[...] = jnp.zeros_like(agg_sc)
        cnt_sc[...] = jnp.zeros_like(cnt_sc)

    # coord_mlp (layer-1 matmul hoisted to the wrapper, only SiLU runs here)
    m = x1_ref[...]
    m = m * jax.nn.sigmoid(m)                                         # SiLU
    m = jnp.dot(m, w2_ref[...], preferred_element_type=jnp.float32) + b2_ref[...]
    m = m * jax.nn.sigmoid(m)                                         # SiLU

    # final [H,1] projection off the MXU: VPU multiply + lane reduce
    s = jnp.sum(m * w3_ref[...], axis=-1, keepdims=True)              # [TE, 1]
    if tanh:
        s = jnp.tanh(s) * coords_range
    s = s * emask_ref[...]                                            # edge mask

    te = row_ref.shape[0]
    n = out_ref.shape[1]
    onehot = (jax.lax.broadcasted_iota(jnp.int32, (te, n), 1)
              == row_ref[...]).astype(jnp.float32)                    # [TE, N]

    # Segment sum: fold the per-edge scale into the one-hot so the matmul is
    # in natural orientation and no [E,1]->[1,E] relayout is needed.
    agg_sc[...] += jnp.dot(cdiff_ref[...], onehot * s,
                           preferred_element_type=jnp.float32)        # [3, N]
    if agg_method == 'mean':
        cnt_sc[...] += jnp.sum(onehot, axis=0, keepdims=True)         # [1, N]

    @pl.when(k == pl.num_programs(0) - 1)
    def _finalize():
        if agg_method == 'sum':
            agg = agg_sc[...] / norm_factor
        else:  # 'mean'
            cnt = jnp.where(cnt_sc[...] == 0.0, 1.0, cnt_sc[...])
            agg = agg_sc[...] / cnt
        out_ref[...] = (coord_ref[...] + agg) * nmask_ref[...]


# ----------------------------------------------------------------------------
# Wrapper
# ----------------------------------------------------------------------------
def equivariant_update(h, coord, edge_index, coord_diff, edge_attr,
                       node_mask, edge_mask, params, *,
                       tanh=False, coords_range=10.0,
                       normalization_factor=1.0, aggregation_method='sum',
                       edge_tile=512):
    assert edge_tile % 128 == 0
    row, col = edge_index
    row = row.astype(jnp.int32)
    col = col.astype(jnp.int32)

    w1, b1, w2, b2, w3 = [p.astype(jnp.float32) for p in params]
    h = h.astype(jnp.float32)
    N, H = h.shape
    E = row.shape[0]

    # ---- layer-1 hoist: per-node projections + per-edge gather (JAX glue) ----
    w1a, w1b, w1c = w1[:H], w1[H:2 * H], w1[2 * H:]
    hWa = h @ w1a                                              # [N, H]
    hWb = h @ w1b                                              # [N, H]
    x1 = (hWa[row] + hWb[col]
          + edge_attr.astype(jnp.float32) @ w1c + b1)          # [E, H]

    # ---- edge padding / tiling (padded rows use segment id N -> dropped) ----
    e128 = ((E + 127) // 128) * 128
    TE = min(edge_tile, e128)
    KT = -(-E // TE)
    Ep = KT * TE
    pad = Ep - E

    x1_p = jnp.pad(x1, ((0, pad), (0, 0)))
    cdiff_t = jnp.pad(coord_diff.astype(jnp.float32), ((0, pad), (0, 0))).T  # [3, Ep]
    emask_p = jnp.pad(edge_mask.astype(jnp.float32), ((0, pad), (0, 0)))     # [Ep, 1]
    row_p = jnp.pad(row, (0, pad), constant_values=N).reshape(-1, 1)         # [Ep, 1]

    coord_t = coord.astype(jnp.float32).T                      # [3, N]
    nmask_t = node_mask.astype(jnp.float32).T                  # [1, N]
    w3_row = w3.T                                              # [1, H]

    kernel = functools.partial(
        _equiv_update_kernel, bool(tanh), float(coords_range),
        float(normalization_factor), aggregation_method)

    grid_spec = pltpu.PrefetchScalarGridSpec(
        num_scalar_prefetch=0,
        grid=(KT,),
        in_specs=[
            pl.BlockSpec((TE, H), lambda k: (k, 0)),   # x1
            pl.BlockSpec((3, TE), lambda k: (0, k)),   # coord_diff (lane-dense)
            pl.BlockSpec((TE, 1), lambda k: (k, 0)),   # edge mask
            pl.BlockSpec((TE, 1), lambda k: (k, 0)),   # row ids
            pl.BlockSpec((3, N),  lambda k: (0, 0)),   # coord (resident)
            pl.BlockSpec((1, N),  lambda k: (0, 0)),   # node mask (resident)
            pl.BlockSpec((H, H),  lambda k: (0, 0)),   # w2
            pl.BlockSpec((1, H),  lambda k: (0, 0)),   # b2
            pl.BlockSpec((1, H),  lambda k: (0, 0)),   # w3 (row)
        ],
        out_specs=pl.BlockSpec((3, N), lambda k: (0, 0)),
        scratch_shapes=[pltpu.VMEM((3, N), jnp.float32),
                        pltpu.VMEM((1, N), jnp.float32)],
    )

    out_t = pl.pallas_call(
        kernel,
        out_shape=jax.ShapeDtypeStruct((3, N), jnp.float32),
        grid_spec=grid_spec,
        compiler_params=pltpu.CompilerParams(
            dimension_semantics=("arbitrary",)),
    )(x1_p, cdiff_t, emask_p, row_p, coord_t, nmask_t, w2, b2, w3_row)

    return out_t.T                                             # [N, 3]


# ----------------------------------------------------------------------------
# Pure-JAX reference (mirrors the PyTorch forward) for verification
# ----------------------------------------------------------------------------
def reference(h, coord, edge_index, coord_diff, edge_attr, node_mask, edge_mask,
              params, *, tanh=False, coords_range=10.0,
              normalization_factor=1.0, aggregation_method='sum'):
    row, col = edge_index
    w1, b1, w2, b2, w3 = params
    x = jnp.concatenate([h[row], h[col], edge_attr], axis=1)
    m = jax.nn.silu(x @ w1 + b1)
    m = jax.nn.silu(m @ w2 + b2)
    s = m @ w3
    if tanh:
        s = jnp.tanh(s) * coords_range
    trans = coord_diff * s
    trans = trans * edge_mask
    N = coord.shape[0]
    agg = jax.ops.segment_sum(trans, row, num_segments=N)
    if aggregation_method == 'sum':
        agg = agg / normalization_factor
    else:
        counts = jax.ops.segment_sum(jnp.ones_like(trans), row, num_segments=N)
        counts = jnp.where(counts == 0, 1.0, counts)
        agg = agg / counts
    return (coord + agg) * node_mask


# ----------------------------------------------------------------------------
# Deterministic parameter init (shapes follow the PyTorch __init__)
# ----------------------------------------------------------------------------
def init_params(key, hidden_nf, edges_in_d):
    input_edge = hidden_nf * 2 + edges_in_d
    k1, k2, k3, k4, k5 = jax.random.split(key, 5)

    def linear_init(kw, kb, fan_in, fan_out):
        bound = 1.0 / jnp.sqrt(fan_in)
        w = jax.random.uniform(kw, (fan_in, fan_out), jnp.float32, -bound, bound)
        b = jax.random.uniform(kb, (1, fan_out), jnp.float32, -bound, bound)
        return w, b

    w1, b1 = linear_init(k1, k2, input_edge, hidden_nf)
    w2, b2 = linear_init(k3, k4, hidden_nf, hidden_nf)
    # final layer: xavier_uniform with gain=0.001, no bias
    a = 0.001 * jnp.sqrt(6.0 / (hidden_nf + 1))
    w3 = jax.random.uniform(k5, (hidden_nf, 1), jnp.float32, -a, a)
    return (w1, b1, w2, b2, w3)


if __name__ == "__main__":
    key = jax.random.PRNGKey(0)
    N, H, ED = 8, 32, 1                 # nodes, hidden_nf, edges_in_d
    # fully connected graph without self-loops
    rows, cols = [], []
    for i in range(N):
        for j in range(N):
            if i != j:
                rows.append(i)
                cols.append(j)
    row = jnp.array(rows, dtype=jnp.int32)
    col = jnp.array(cols, dtype=jnp.int32)
    E = row.shape[0]                    # 56

    ks = jax.random.split(key, 8)
    h = jax.random.normal(ks[0], (N, H), jnp.float32)
    coord = jax.random.normal(ks[1], (N, 3), jnp.float32)
    coord_diff = coord[row] - coord[col]
    edge_attr = jax.random.normal(ks[2], (E, ED), jnp.float32)
    edge_mask = (jax.random.uniform(ks[3], (E, 1)) > 0.2).astype(jnp.float32)
    node_mask = (jax.random.uniform(ks[4], (N, 1)) > 0.1).astype(jnp.float32)
    params = init_params(ks[5], H, ED)

    ok = True
    for kwargs in (
        dict(tanh=True, coords_range=10.0,
             normalization_factor=4.0, aggregation_method='sum'),
        dict(tanh=False, coords_range=10.0,
             normalization_factor=1.0, aggregation_method='mean'),
    ):
        out = equivariant_update(h, coord, (row, col), coord_diff, edge_attr,
                                 node_mask, edge_mask, params, **kwargs)
        out = jax.block_until_ready(out)
        ref = reference(h, coord, (row, col), coord_diff, edge_attr,
                        node_mask, edge_mask, params, **kwargs)
        ok &= (out.shape == (N, 3) and out.dtype == jnp.float32)
        ok &= bool(jnp.allclose(out, ref, atol=1e-5, rtol=1e-5))

    assert ok, "mismatch vs reference"
    print("KERNEL_OK")
</pallas_src>

<mosaic_0001>
module attributes {stable_mosaic.version = 11 : i64} {
  func.func @_equiv_update_kernel(%arg0: i32, %arg1: memref<128x32xf32, #tpu.memory_space<vmem>>, %arg2: memref<3x128xf32, #tpu.memory_space<vmem>>, %arg3: memref<128x1xf32, #tpu.memory_space<vmem>>, %arg4: memref<128x1xi32, #tpu.memory_space<vmem>>, %arg5: memref<3x8xf32, #tpu.memory_space<vmem>>, %arg6: memref<1x8xf32, #tpu.memory_space<vmem>>, %arg7: memref<32x32xf32, #tpu.memory_space<vmem>>, %arg8: memref<1x32xf32, #tpu.memory_space<vmem>>, %arg9: memref<1x32xf32, #tpu.memory_space<vmem>>, %arg10: memref<3x8xf32, #tpu.memory_space<vmem>>, %arg11: memref<3x8xf32, #tpu.memory_space<vmem>>, %arg12: memref<1x8xf32, #tpu.memory_space<vmem>>) attributes {dimension_semantics = [#tpu.dimension_semantics<arbitrary>], iteration_bounds = array<i64: 1>, scalar_prefetch = 0 : i64, scratch_operands = 2 : i64, tpu.core_type = #tpu.core_type<tc>, window_params = [{transform_indices = @transform_0, window_bounds = array<i64: 128, 32>}, {transform_indices = @transform_1, window_bounds = array<i64: 3, 128>}, {transform_indices = @transform_2, window_bounds = array<i64: 128, 1>}, {transform_indices = @transform_3, window_bounds = array<i64: 128, 1>}, {pipeline_mode = #tpu.pipeline_mode<synchronous>, transform_indices = @transform_4, window_bounds = array<i64: 3, 8>}, {pipeline_mode = #tpu.pipeline_mode<synchronous>, transform_indices = @transform_5, window_bounds = array<i64: 1, 8>}, {pipeline_mode = #tpu.pipeline_mode<synchronous>, transform_indices = @transform_6, window_bounds = array<i64: 32, 32>}, {pipeline_mode = #tpu.pipeline_mode<synchronous>, transform_indices = @transform_7, window_bounds = array<i64: 1, 32>}, {pipeline_mode = #tpu.pipeline_mode<synchronous>, transform_indices = @transform_8, window_bounds = array<i64: 1, 32>}, {pipeline_mode = #tpu.pipeline_mode<synchronous>, transform_indices = @transform_9, window_bounds = array<i64: 3, 8>}]} {
    %c0_i32 = arith.constant 0 : i32
    %0 = arith.cmpi eq, %arg0, %c0_i32 : i32
    %1 = arith.extui %0 : i1 to i32
    %c0_i32_0 = arith.constant 0 : i32
    %2 = arith.cmpi ne, %1, %c0_i32_0 : i32
    scf.if %2 {
      %cst_25 = arith.constant 0.000000e+00 : f32
      %47 = vector.broadcast %cst_25 : f32 to vector<3x8xf32>
      %c0_26 = arith.constant 0 : index
      %c0_27 = arith.constant 0 : index
      %48 = vector.load %arg11[%c0_26, %c0_27] : memref<3x8xf32, #tpu.memory_space<vmem>>, vector<3x8xf32>
      tpu.vector_store %arg11[%c0_26, %c0_27], %47 {strides = array<i32>} : memref<3x8xf32, #tpu.memory_space<vmem>>, vector<3x8xf32>,
      %cst_28 = arith.constant 0.000000e+00 : f32
      %49 = vector.broadcast %cst_28 : f32 to vector<1x8xf32>
      %c0_29 = arith.constant 0 : index
      %c0_30 = arith.constant 0 : index
      %50 = vector.load %arg12[%c0_29, %c0_30] : memref<1x8xf32, #tpu.memory_space<vmem>>, vector<1x8xf32>
      tpu.vector_store %arg12[%c0_29, %c0_30], %49 {strides = array<i32>} : memref<1x8xf32, #tpu.memory_space<vmem>>, vector<1x8xf32>,
    } else {
    }
    %c0 = arith.constant 0 : index
    %c0_1 = arith.constant 0 : index
    %3 = vector.load %arg1[%c0, %c0_1] : memref<128x32xf32, #tpu.memory_space<vmem>>, vector<128x32xf32>
    %4 = arith.negf %3 : vector<128x32xf32>
    %5 = math.exp %4 : vector<128x32xf32>
    %cst = arith.constant 1.000000e+00 : f32
    %6 = vector.broadcast %cst : f32 to vector<128x32xf32>
    %7 = arith.addf %6, %5 : vector<128x32xf32>
    %8 = arith.divf %6, %7 : vector<128x32xf32>
    %9 = arith.mulf %3, %8 : vector<128x32xf32>
    %c0_2 = arith.constant 0 : index
    %c0_3 = arith.constant 0 : index
    %10 = vector.load %arg7[%c0_2, %c0_3] : memref<32x32xf32, #tpu.memory_space<vmem>>, vector<32x32xf32>
    %cst_4 = arith.constant dense<0.000000e+00> : vector<128x32xf32>
    %11 = tpu.matmul %9, %10, %cst_4 {dimension_numbers = #tpu.dot_dimension_numbers<[1], [0], [0], [1], [0, 0, 1, 1], [], []>} : vector<128x32xf32>, vector<32x32xf32>, vector<128x32xf32> -> vector<128x32xf32>
    %c0_5 = arith.constant 0 : index
    %c0_6 = arith.constant 0 : index
    %12 = vector.load %arg8[%c0_5, %c0_6] : memref<1x32xf32, #tpu.memory_space<vmem>>, vector<1x32xf32>
    %13 = vector.broadcast %12 : vector<1x32xf32> to vector<128x32xf32>
    %14 = arith.addf %11, %13 : vector<128x32xf32>
    %15 = arith.negf %14 : vector<128x32xf32>
    %16 = math.exp %15 : vector<128x32xf32>
    %cst_7 = arith.constant 1.000000e+00 : f32
    %17 = vector.broadcast %cst_7 : f32 to vector<128x32xf32>
    %18 = arith.addf %17, %16 : vector<128x32xf32>
    %19 = arith.divf %17, %18 : vector<128x32xf32>
    %20 = arith.mulf %14, %19 : vector<128x32xf32>
    %c0_8 = arith.constant 0 : index
    %c0_9 = arith.constant 0 : index
    %21 = vector.load %arg9[%c0_8, %c0_9] : memref<1x32xf32, #tpu.memory_space<vmem>>, vector<1x32xf32>
    %22 = vector.broadcast %21 : vector<1x32xf32> to vector<128x32xf32>
    %23 = arith.mulf %20, %22 : vector<128x32xf32>
    %cst_10 = arith.constant dense<0.000000e+00> : vector<128xf32>
    %24 = vector.multi_reduction <add>, %23, %cst_10 [1] : vector<128x32xf32> to vector<128xf32>
    %25 = vector.shape_cast %24 : vector<128xf32> to vector<128x1xf32>
    %26 = math.tanh %25 : vector<128x1xf32>
    %cst_11 = arith.constant 1.000000e+01 : f32
    %27 = vector.broadcast %cst_11 : f32 to vector<128x1xf32>
    %28 = arith.mulf %26, %27 : vector<128x1xf32>
    %c0_12 = arith.constant 0 : index
    %c0_13 = arith.constant 0 : index
    %29 = vector.load %arg3[%c0_12, %c0_13] : memref<128x1xf32, #tpu.memory_space<vmem>>, vector<128x1xf32>
    %30 = arith.mulf %28, %29 : vector<128x1xf32>
    %31 = tpu.iota {dimensions = array<i32: 1>} : vector<128x8xi32>
    %c0_14 = arith.constant 0 : index
    %c0_15 = arith.constant 0 : index
    %32 = vector.load %arg4[%c0_14, %c0_15] : memref<128x1xi32, #tpu.memory_space<vmem>>, vector<128x1xi32>
    %33 = vector.broadcast %32 : vector<128x1xi32> to vector<128x8xi32>
    %34 = arith.cmpi eq, %31, %33 : vector<128x8xi32>
    %35 = arith.extui %34 : vector<128x8xi1> to vector<128x8xi32>
    %36 = arith.sitofp %35 : vector<128x8xi32> to vector<128x8xf32>
    %c0_16 = arith.constant 0 : index
    %c0_17 = arith.constant 0 : index
    %37 = vector.load %arg11[%c0_16, %c0_17] : memref<3x8xf32, #tpu.memory_space<vmem>>, vector<3x8xf32>
    %c0_18 = arith.constant 0 : index
    %c0_19 = arith.constant 0 : index
    %38 = vector.load %arg2[%c0_18, %c0_19] : memref<3x128xf32, #tpu.memory_space<vmem>>, vector<3x128xf32>
    %39 = vector.broadcast %30 : vector<128x1xf32> to vector<128x8xf32>
    %40 = arith.mulf %36, %39 : vector<128x8xf32>
    %cst_20 = arith.constant dense<0.000000e+00> : vector<3x8xf32>
    %41 = tpu.matmul %38, %40, %cst_20 {dimension_numbers = #tpu.dot_dimension_numbers<[1], [0], [0], [1], [0, 0, 1, 1], [], []>} : vector<3x128xf32>, vector<128x8xf32>, vector<3x8xf32> -> vector<3x8xf32>
    %42 = arith.addf %37, %41 : vector<3x8xf32>
    %c0_21 = arith.constant 0 : index
    %c0_22 = arith.constant 0 : index
    %43 = vector.load %arg11[%c0_21, %c0_22] : memref<3x8xf32, #tpu.memory_space<vmem>>, vector<3x8xf32>
    tpu.vector_store %arg11[%c0_21, %c0_22], %42 {strides = array<i32>} : memref<3x8xf32, #tpu.memory_space<vmem>>, vector<3x8xf32>,
    %c0_i32_23 = arith.constant 0 : i32
    %44 = arith.cmpi eq, %arg0, %c0_i32_23 : i32
    %45 = arith.extui %44 : i1 to i32
    %c0_i32_24 = arith.constant 0 : i32
    %46 = arith.cmpi ne, %45, %c0_i32_24 : i32
    scf.if %46 {
      %c0_25 = arith.constant 0 : index
      %c0_26 = arith.constant 0 : index
      %47 = vector.load %arg11[%c0_25, %c0_26] : memref<3x8xf32, #tpu.memory_space<vmem>>, vector<3x8xf32>
      %cst_27 = arith.constant 4.000000e+00 : f32
      %48 = vector.broadcast %cst_27 : f32 to vector<3x8xf32>
      %49 = arith.divf %47, %48 : vector<3x8xf32>
      %c0_28 = arith.constant 0 : index
      %c0_29 = arith.constant 0 : index
      %50 = vector.load %arg5[%c0_28, %c0_29] : memref<3x8xf32, #tpu.memory_space<vmem>>, vector<3x8xf32>
      %51 = arith.addf %50, %49 : vector<3x8xf32>
      %c0_30 = arith.constant 0 : index
      %c0_31 = arith.constant 0 : index
      %52 = vector.load %arg6[%c0_30, %c0_31] : memref<1x8xf32, #tpu.memory_space<vmem>>, vector<1x8xf32>
      %53 = vector.broadcast %52 : vector<1x8xf32> to vector<3x8xf32>
      %54 = arith.mulf %51, %53 : vector<3x8xf32>
      %c0_32 = arith.constant 0 : index
      %c0_33 = arith.constant 0 : index
      %55 = vector.load %arg10[%c0_32, %c0_33] : memref<3x8xf32, #tpu.memory_space<vmem>>, vector<3x8xf32>
      tpu.vector_store %arg10[%c0_32, %c0_33], %54 {strides = array<i32>} : memref<3x8xf32, #tpu.memory_space<vmem>>, vector<3x8xf32>,
    } else {
    }
    return
  }
  func.func @transform_0(%arg0: i32) -> (i32, i32) {
    %c0_i32 = arith.constant 0 : i32
    %c0_i32_0 = arith.constant 0 : i32
    return %arg0, %c0_i32 : i32, i32
  }
  func.func @transform_1(%arg0: i32) -> (i32, i32) {
    %c0_i32 = arith.constant 0 : i32
    %c0_i32_0 = arith.constant 0 : i32
    return %c0_i32, %arg0 : i32, i32
  }
  func.func @transform_2(%arg0: i32) -> (i32, i32) {
    %c0_i32 = arith.constant 0 : i32
    %c0_i32_0 = arith.constant 0 : i32
    return %arg0, %c0_i32 : i32, i32
  }
  func.func @transform_3(%arg0: i32) -> (i32, i32) {
    %c0_i32 = arith.constant 0 : i32
    %c0_i32_0 = arith.constant 0 : i32
    return %arg0, %c0_i32 : i32, i32
  }
  func.func @transform_4(%arg0: i32) -> (i32, i32) {
    %c0_i32 = arith.constant 0 : i32
    %c0_i32_0 = arith.constant 0 : i32
    %c0_i32_1 = arith.constant 0 : i32
    return %c0_i32, %c0_i32_0 : i32, i32
  }
  func.func @transform_5(%arg0: i32) -> (i32, i32) {
    %c0_i32 = arith.constant 0 : i32
    %c0_i32_0 = arith.constant 0 : i32
    %c0_i32_1 = arith.constant 0 : i32
    return %c0_i32, %c0_i32_0 : i32, i32
  }
  func.func @transform_6(%arg0: i32) -> (i32, i32) {
    %c0_i32 = arith.constant 0 : i32
    %c0_i32_0 = arith.constant 0 : i32
    %c0_i32_1 = arith.constant 0 : i32
    return %c0_i32, %c0_i32_0 : i32, i32
  }
  func.func @transform_7(%arg0: i32) -> (i32, i32) {
    %c0_i32 = arith.constant 0 : i32
    %c0_i32_0 = arith.constant 0 : i32
    %c0_i32_1 = arith.constant 0 : i32
    return %c0_i32, %c0_i32_0 : i32, i32
  }
  func.func @transform_8(%arg0: i32) -> (i32, i32) {
    %c0_i32 = arith.constant 0 : i32
    %c0_i32_0 = arith.constant 0 : i32
    %c0_i32_1 = arith.constant 0 : i32
    return %c0_i32, %c0_i32_0 : i32, i32
  }
  func.func @transform_9(%arg0: i32) -> (i32, i32) {
    %c0_i32 = arith.constant 0 : i32
    %c0_i32_0 = arith.constant 0 : i32
    %c0_i32_1 = arith.constant 0 : i32
    return %c0_i32, %c0_i32_0 : i32, i32
  }
}

</mosaic_0001>

<llo_original>
// kernel: tpu_custom_call.1
$region0: #{tpu_custom_call.1}
  #allocation0 [shape = 'u32[]', space=smem, size = 0x4, offset = 0x4, fixed_abs, tag = 'smem constant byte address 0x4 - core index']
  #allocation1 [shape = 'u32[144,128]{1,0:T(1,128)}', space=vmem, size = 0x12000, scoped, tag = 'internal scratch']
  #allocation2 [shape = 'f32[3,8]{1,0:T(4,128)}', space=vmem, size = 0x800, scoped, tag = 'scratch operand']
  #allocation3 [shape = 'f32[1,8]{1,0:T(1,128)}', space=vmem, size = 0x200, scoped, tag = 'scratch operand']
  %s0 = inlined_call_operand.vmem [shape: f32[128,32], index: 0, kind: input, shape index: {}]
  %s1 = inlined_call_operand.vmem [shape: f32[3,128], index: 1, kind: input, shape index: {}]
  %s2 = inlined_call_operand.vmem [shape: f32[128,1], index: 2, kind: input, shape index: {}]
  %s3 = inlined_call_operand.vmem [shape: s32[128,1], index: 3, kind: input, shape index: {}]
  %s4 = inlined_call_operand.vmem [shape: f32[3,8], index: 4, kind: input, shape index: {}]
  %s5 = inlined_call_operand.vmem [shape: f32[1,8], index: 5, kind: input, shape index: {}]
  %s6 = inlined_call_operand.vmem [shape: f32[32,32], index: 6, kind: input, shape index: {}]
  %s7 = inlined_call_operand.vmem [shape: f32[1,32], index: 7, kind: input, shape index: {}]
  %s8 = inlined_call_operand.vmem [shape: f32[1,32], index: 8, kind: input, shape index: {}]
  %s9 = inlined_call_operand.hbm [shape: f32[3,8], index: 9, kind: output, shape index: {}]
  %s10 = sld [smem:[#allocation0]]
  $region54: #{tpu_custom_call.1} parent=0
    _
  %s12 = ssub.s32 1, %s10
  %s13 = scalar_select 0, %s12, %s10
  $region1: #{tpu_custom_call.1} parent=0
    #allocation4 [shape = 'u8[2048]{0}', space=vmem, size = 0x800, scoped, tag = 'output window, operand 0, single buffered']
    #allocation5 [shape = 's32[1]{0}', space=sflag, size = 0x4, scoped, tag = 'scoped memory for tpu_custom_call.1']
    %14 = vsyncpa [#allocation5], 0
    // Predicated region
    $region2: #{tpu_custom_call.1} parent=1 // pred_check
      _
    $region3: #{tpu_custom_call.1} parent=1 // pred_check_branch
      %16 = sbr.rel (0) target = $region5
    $region4: #{tpu_custom_call.1} parent=1 // pred_region
      _
    $region5: #{tpu_custom_call.1} parent=1 // pred_fallthru
      _
    // Predicated region
    $region6: #{tpu_custom_call.1} parent=1 // pred_check
      _
    $region7: #{tpu_custom_call.1} parent=1 // pred_check_branch
      %18 = sbr.rel (0) target = $region9
    $region8: #{tpu_custom_call.1} parent=1 // pred_region
      _
    $region9: #{tpu_custom_call.1} parent=1 // pred_fallthru
      _
    // Predicated region
    $region10: #{tpu_custom_call.1} parent=1 // pred_check
      _
    $region11: #{tpu_custom_call.1} parent=1 // pred_check_branch
      %20 = sbr.rel (0) target = $region13
    $region12: #{tpu_custom_call.1} parent=1 // pred_region
      _
    $region13: #{tpu_custom_call.1} parent=1 // pred_fallthru
      _
    // Predicated region
    $region14: #{tpu_custom_call.1} parent=1 // pred_check
      _
    $region15: #{tpu_custom_call.1} parent=1 // pred_check_branch
      %22 = sbr.rel (0) target = $region17
    $region16: #{tpu_custom_call.1} parent=1 // pred_region
      _
    $region17: #{tpu_custom_call.1} parent=1 // pred_fallthru
      _
    // Predicated region
    $region18: #{tpu_custom_call.1} parent=1 // pred_check
      _
    $region19: #{tpu_custom_call.1} parent=1 // pred_check_branch
      %24 = sbr.rel (0) target = $region21
    $region20: #{tpu_custom_call.1} parent=1 // pred_region
      _
    $region21: #{tpu_custom_call.1} parent=1 // pred_fallthru
      _
    // Predicated region
    $region22: #{tpu_custom_call.1} parent=1 // pred_check
      _
    $region23: #{tpu_custom_call.1} parent=1 // pred_check_branch
      %26 = sbr.rel (0) target = $region25
    $region24: #{tpu_custom_call.1} parent=1 // pred_region
      _
    $region25: #{tpu_custom_call.1} parent=1 // pred_fallthru
      _
    // Predicated region
    $region26: #{tpu_custom_call.1} parent=1 // pred_check
      _
    $region27: #{tpu_custom_call.1} parent=1 // pred_check_branch
      %28 = sbr.rel (0) target = $region29
    $region28: #{tpu_custom_call.1} parent=1 // pred_region
      _
    $region29: #{tpu_custom_call.1} parent=1 // pred_fallthru
      _
    // Predicated region
    $region30: #{tpu_custom_call.1} parent=1 // pred_check
      _
    $region31: #{tpu_custom_call.1} parent=1 // pred_check_branch
      %30 = sbr.rel (0) target = $region33
    $region32: #{tpu_custom_call.1} parent=1 // pred_region
      _
    $region33: #{tpu_custom_call.1} parent=1 // pred_fallthru
      _
    // Predicated region
    $region34: #{tpu_custom_call.1} parent=1 // pred_check
      _
    $region35: #{tpu_custom_call.1} parent=1 // pred_check_branch
      %32 = sbr.rel (0) target = $region37
    $region36: #{tpu_custom_call.1} parent=1 // pred_region
      _
    $region37: #{tpu_custom_call.1} parent=1 // pred_fallthru
      _
    %p33 = scmp.eq.s32.totalorder 0, 0
    // Predicated region
    $region38: #{tpu_custom_call.1} parent=1 // pred_check
      %p34 = pneg %p33
    $region39: #{tpu_custom_call.1} parent=1 // pred_check_branch
      %36 = sbr.rel (%p34) target = $region41
    $region40: #{tpu_custom_call.1} parent=1 // pred_region
      %vm37 = vcmask 59392
      %38 = vst.msk [vmem:[#allocation2] sm:$0x7] %vm37, 0.0
      %vm39 = vcmask 57344
      %40 = vst.msk [vmem:[#allocation3] sm:$0x1] %vm39, 0.0
    $region41: #{tpu_custom_call.1} parent=1 // pred_fallthru
      _
    %v41 = vld [vmem:[%s0] sm:$0xff]
    %v42 = vld [vmem:[%s0 + $0x8] sm:$0xff]
    %v43 = vld [vmem:[%s0 + $0x10] sm:$0xff]
    %v44 = vld [vmem:[%s0 + $0x18] sm:$0xff]
    %v45 = vld [vmem:[%s0 + $0x20] sm:$0xff]
    %v46 = vld [vmem:[%s0 + $0x28] sm:$0xff]
    %v47 = vld [vmem:[%s0 + $0x30] sm:$0xff]
    %v48 = vld [vmem:[%s0 + $0x38] sm:$0xff]
    %v49 = vld [vmem:[%s0 + $0x40] sm:$0xff]
    %v50 = vld [vmem:[%s0 + $0x48] sm:$0xff]
    %v51 = vld [vmem:[%s0 + $0x50] sm:$0xff]
    %v52 = vld [vmem:[%s0 + $0x58] sm:$0xff]
    %v53 = vld [vmem:[%s0 + $0x60] sm:$0xff]
    %v54 = vld [vmem:[%s0 + $0x68] sm:$0xff]
    %v55 = vld [vmem:[%s0 + $0x70] sm:$0xff]
    %v56 = vld [vmem:[%s0 + $0x78] sm:$0xff]
    %v57 = vxor.u32 %v41, 2147483648
    %v58 = vxor.u32 %v42, 2147483648
    %v59 = vxor.u32 %v43, 2147483648
    %v60 = vxor.u32 %v44, 2147483648
    %v61 = vxor.u32 %v45, 2147483648
    %v62 = vxor.u32 %v46, 2147483648
    %v63 = vxor.u32 %v47, 2147483648
    %v64 = vxor.u32 %v48, 2147483648
    %v65 = vxor.u32 %v49, 2147483648
    %v66 = vxor.u32 %v50, 2147483648
    %v67 = vxor.u32 %v51, 2147483648
    %v68 = vxor.u32 %v52, 2147483648
    %v69 = vxor.u32 %v53, 2147483648
    %v70 = vxor.u32 %v54, 2147483648
    %v71 = vxor.u32 %v55, 2147483648
    %v72 = vxor.u32 %v56, 2147483648
    %v73 = vmul.f32 %v57, 1.442695
    %v74 = vpow.pop %v73
    %v75 = vmul.f32 %v58, 1.442695
    %v76 = vpow.pop %v75
    %v77 = vmul.f32 %v59, 1.442695
    %v78 = vpow.pop %v77
    %v79 = vmul.f32 %v60, 1.442695
    %v80 = vpow.pop %v79
    %v81 = vmul.f32 %v61, 1.442695
    %v82 = vpow.pop %v81
    %v83 = vmul.f32 %v62, 1.442695
    %v84 = vpow.pop %v83
    %v85 = vmul.f32 %v63, 1.442695
    %v86 = vpow.pop %v85
    %v87 = vmul.f32 %v64, 1.442695
    %v88 = vpow.pop %v87
    %v89 = vmul.f32 %v65, 1.442695
    %v90 = vpow.pop %v89
    %v91 = vmul.f32 %v66, 1.442695
    %v92 = vpow.pop %v91
    %v93 = vmul.f32 %v67, 1.442695
    %v94 = vpow.pop %v93
    %v95 = vmul.f32 %v68, 1.442695
    %v96 = vpow.pop %v95
    %v97 = vmul.f32 %v69, 1.442695
    %v98 = vpow.pop %v97
    %v99 = vmul.f32 %v70, 1.442695
    %v100 = vpow.pop %v99
    %v101 = vmul.f32 %v71, 1.442695
    %v102 = vpow.pop %v101
    %v103 = vmul.f32 %v72, 1.442695
    %v104 = vpow.pop %v103
    %v105 = vadd.f32 %v74, 1.0
    %v106 = vadd.f32 %v76, 1.0
    %v107 = vadd.f32 %v78, 1.0
    %v108 = vadd.f32 %v80, 1.0
    %v109 = vadd.f32 %v82, 1.0
    %v110 = vadd.f32 %v84, 1.0
    %v111 = vadd.f32 %v86, 1.0
    %v112 = vadd.f32 %v88, 1.0
    %v113 = vadd.f32 %v90, 1.0
    %v114 = vadd.f32 %v92, 1.0
    %v115 = vadd.f32 %v94, 1.0
    %v116 = vadd.f32 %v96, 1.0
    %v117 = vadd.f32 %v98, 1.0
    %v118 = vadd.f32 %v100, 1.0
    %v119 = vadd.f32 %v102, 1.0
    %v120 = vadd.f32 %v104, 1.0
    %v121 = vrcp.pop %v105
    %v122 = vmul.f32 1.0, %v121
    %v123 = vrcp.pop %v106
    %v124 = vmul.f32 1.0, %v123
    %v125 = vrcp.pop %v107
    %v126 = vmul.f32 1.0, %v125
    %v127 = vrcp.pop %v108
    %v128 = vmul.f32 1.0, %v127
    %v129 = vrcp.pop %v109
    %v130 = vmul.f32 1.0, %v129
    %v131 = vrcp.pop %v110
    %v132 = vmul.f32 1.0, %v131
    %v133 = vrcp.pop %v111
    %v134 = vmul.f32 1.0, %v133
    %v135 = vrcp.pop %v112
    %v136 = vmul.f32 1.0, %v135
    %v137 = vrcp.pop %v113
    %v138 = vmul.f32 1.0, %v137
    %v139 = vrcp.pop %v114
    %v140 = vmul.f32 1.0, %v139
    %v141 = vrcp.pop %v115
    %v142 = vmul.f32 1.0, %v141
    %v143 = vrcp.pop %v116
    %v144 = vmul.f32 1.0, %v143
    %v145 = vrcp.pop %v117
    %v146 = vmul.f32 1.0, %v145
    %v147 = vrcp.pop %v118
    %v148 = vmul.f32 1.0, %v147
    %v149 = vrcp.pop %v119
    %v150 = vmul.f32 1.0, %v149
    %v151 = vrcp.pop %v120
    %v152 = vmul.f32 1.0, %v151
    %v153 = vmul.f32 %v41, %v122
    %v154 = vmul.f32 %v42, %v124
    %v155 = vmul.f32 %v43, %v126
    %v156 = vmul.f32 %v44, %v128
    %v157 = vmul.f32 %v45, %v130
    %v158 = vmul.f32 %v46, %v132
    %v159 = vmul.f32 %v47, %v134
    %v160 = vmul.f32 %v48, %v136
    %v161 = vmul.f32 %v49, %v138
    %v162 = vmul.f32 %v50, %v140
    %v163 = vmul.f32 %v51, %v142
    %v164 = vmul.f32 %v52, %v144
    %v165 = vmul.f32 %v53, %v146
    %v166 = vmul.f32 %v54, %v148
    %v167 = vmul.f32 %v55, %v150
    %v168 = vmul.f32 %v56, %v152
    %v169 = vld [vmem:[%s6] sm:$0xff]
    %v170 = vld [vmem:[%s6 + $0x8] sm:$0xff]
    %v171 = vld [vmem:[%s6 + $0x10] sm:$0xff]
    %v172 = vld [vmem:[%s6 + $0x18] sm:$0xff]
    %v173 = vld [vmem:[%s7] sm:$0x1]
    %v175 = vlaneseq
    %v176 = vshrl.u32 %v175, 7
    %v177 = vsub.s32 0, %v176
    %v178 = vrot.slane %v173, %v177
    %vm180 = vcmask 261120
    %v182 = vsel %vm180, %v153, 0
    %v185 = vsel %vm180, %v154, 0
    %v188 = vsel %vm180, %v155, 0
    %v191 = vsel %vm180, %v156, 0
    %v194 = vsel %vm180, %v157, 0
    %v197 = vsel %vm180, %v158, 0
    %v200 = vsel %vm180, %v159, 0
    %v203 = vsel %vm180, %v160, 0
    %v206 = vsel %vm180, %v161, 0
    %v209 = vsel %vm180, %v162, 0
    %v212 = vsel %vm180, %v163, 0
    %v215 = vsel %vm180, %v164, 0
    %v218 = vsel %vm180, %v165, 0
    %v221 = vsel %vm180, %v166, 0
    %v224 = vsel %vm180, %v167, 0
    %v227 = vsel %vm180, %v168, 0
    %229 = vmatprep.subr.mxu0 0.0
    %230 = vmatpush1.msra.mxu0 0.0
    %231 = vmatprep.subr.mxu0 0.0
    %232 = vmatpush1.msra.mxu0 0.0
    %233 = vmatprep.subr.mxu0 0.0
    %234 = vmatpush1.msra.mxu0 0.0
    %235 = vmatprep.subr.mxu0 0.0
    %236 = vmatpush1.msra.mxu0 0.0
    %237 = vmatprep.subr.mxu0 0.0
    %238 = vmatpush1.msra.mxu0 0.0
    %239 = vmatprep.subr.mxu0 0.0
    %240 = vmatpush1.msra.mxu0 0.0
    %241 = vmatprep.subr.mxu0 0.0
    %242 = vmatpush1.msra.mxu0 0.0
    %243 = vmatprep.subr.mxu0 0.0
    %244 = vmatpush1.msra.mxu0 0.0
    %245 = vmatprep.subr.mxu0 0.0
    %246 = vmatpush1.msra.mxu0 0.0
    %247 = vmatprep.subr.mxu0 0.0
    %248 = vmatpush1.msra.mxu0 0.0
    %249 = vmatprep.subr.mxu0 0.0
    %250 = vmatpush1.msra.mxu0 0.0
    %251 = vmatprep.subr.mxu0 0.0
    %252 = vmatpush1.msra.mxu0 0.0
    %253 = vmatprep.subr.mxu0 0.0
    %254 = vmatpush1.msra.mxu0 %v172
    %255 = vmatprep.subr.mxu0 0.0
    %256 = vmatpush1.msra.mxu0 %v171
    %257 = vmatprep.subr.mxu0 0.0
    %258 = vmatpush1.msra.mxu0 %v170
    %259 = vmatprep.subr.mxu0 0.0
    %260 = vmatpush1.msra.mxu0 %v169
    %261 = vmatprep.subr.mxu0 0.0
    %262 = vmatpush2.msra.mxu0 0.0
    %263 = vmatprep.subr.mxu0 0.0
    %264 = vmatpush2.msra.mxu0 0.0
    %265 = vmatprep.subr.mxu0 0.0
    %266 = vmatpush2.msra.mxu0 0.0
    %267 = vmatprep.subr.mxu0 0.0
    %268 = vmatpush2.msra.mxu0 0.0
    %269 = vmatprep.subr.mxu0 0.0
    %270 = vmatpush2.msra.mxu0 0.0
    %271 = vmatprep.subr.mxu0 0.0
    %272 = vmatpush2.msra.mxu0 0.0
    %273 = vmatprep.subr.mxu0 0.0
    %274 = vmatpush2.msra.mxu0 0.0
    %275 = vmatprep.subr.mxu0 0.0
    %276 = vmatpush2.msra.mxu0 0.0
    %277 = vmatprep.subr.mxu0 0.0
    %278 = vmatpush2.msra.mxu0 0.0
    %279 = vmatprep.subr.mxu0 0.0
    %280 = vmatpush2.msra.mxu0 0.0
    %281 = vmatprep.subr.mxu0 0.0
    %282 = vmatpush2.msra.mxu0 0.0
    %283 = vmatprep.subr.mxu0 0.0
    %284 = vmatpush2.msra.mxu0 0.0
    %285 = vmatprep.subr.mxu0 0.0
    %286 = vmatpush2.msra.mxu0 0.0
    %287 = vmatprep.subr.mxu0 0.0
    %288 = vmatpush2.msra.mxu0 0.0
    %289 = vmatprep.subr.mxu0 0.0
    %290 = vmatpush2.msra.mxu0 0.0
    %291 = vmatprep.subr.mxu0 0.0
    %292 = vmatpush2.msra.mxu0 0.0
    %293 = vmatprep.mubr.f32.mxu0 0.0
    %294 = vmatmul.mubr.f32.gmra.mxu0 %v182
    %v295 = vpop.f32.mrf.mxu0
    %v296 = vadd.f32 %v178, %v295
    %v297 = vpop.f32.mrf.mxu0
    %298 = vmatprep.mubr.f32.mxu0 0.0
    %299 = vmatmul.mubr.f32.gmra.mxu0 %v185
    %v300 = vpop.f32.mrf.mxu0
    %v301 = vadd.f32 %v178, %v300
    %v302 = vpop.f32.mrf.mxu0
    %303 = vmatprep.mubr.f32.mxu0 0.0
    %304 = vmatmul.mubr.f32.gmra.mxu0 %v188
    %v305 = vpop.f32.mrf.mxu0
    %v306 = vadd.f32 %v178, %v305
    %v307 = vpop.f32.mrf.mxu0
    %308 = vmatprep.mubr.f32.mxu0 0.0
    %309 = vmatmul.mubr.f32.gmra.mxu0 %v191
    %v310 = vpop.f32.mrf.mxu0
    %v311 = vadd.f32 %v178, %v310
    %v312 = vpop.f32.mrf.mxu0
    %313 = vmatprep.mubr.f32.mxu0 0.0
    %314 = vmatmul.mubr.f32.gmra.mxu0 %v194
    %v315 = vpop.f32.mrf.mxu0
    %v316 = vadd.f32 %v178, %v315
    %v317 = vpop.f32.mrf.mxu0
    %318 = vmatprep.mubr.f32.mxu0 0.0
    %319 = vmatmul.mubr.f32.gmra.mxu0 %v197
    %v320 = vpop.f32.mrf.mxu0
    %v321 = vadd.f32 %v178, %v320
    %v322 = vpop.f32.mrf.mxu0
    %323 = vmatprep.mubr.f32.mxu0 0.0
    %324 = vmatmul.mubr.f32.gmra.mxu0 %v200
    %v325 = vpop.f32.mrf.mxu0
    %v326 = vadd.f32 %v178, %v325
    %v327 = vpop.f32.mrf.mxu0
    %328 = vmatprep.mubr.f32.mxu0 0.0
    %329 = vmatmul.mubr.f32.gmra.mxu0 %v203
    %v330 = vpop.f32.mrf.mxu0
    %v331 = vadd.f32 %v178, %v330
    %v332 = vpop.f32.mrf.mxu0
    %333 = vmatprep.mubr.f32.mxu0 0.0
    %334 = vmatmul.mubr.f32.gmra.mxu0 %v206
    %v335 = vpop.f32.mrf.mxu0
    %v336 = vadd.f32 %v178, %v335
    %v337 = vpop.f32.mrf.mxu0
    %338 = vmatprep.mubr.f32.mxu0 0.0
    %339 = vmatmul.mubr.f32.gmra.mxu0 %v209
    %v340 = vpop.f32.mrf.mxu0
    %v341 = vadd.f32 %v178, %v340
    %v342 = vpop.f32.mrf.mxu0
    %343 = vmatprep.mubr.f32.mxu0 0.0
    %344 = vmatmul.mubr.f32.gmra.mxu0 %v212
    %v345 = vpop.f32.mrf.mxu0
    %v346 = vadd.f32 %v178, %v345
    %v347 = vpop.f32.mrf.mxu0
    %348 = vmatprep.mubr.f32.mxu0 0.0
    %349 = vmatmul.mubr.f32.gmra.mxu0 %v215
    %v350 = vpop.f32.mrf.mxu0
    %v351 = vadd.f32 %v178, %v350
    %v352 = vpop.f32.mrf.mxu0
    %353 = vmatprep.mubr.f32.mxu0 0.0
    %354 = vmatmul.mubr.f32.gmra.mxu0 %v218
    %v355 = vpop.f32.mrf.mxu0
    %v356 = vadd.f32 %v178, %v355
    %v357 = vpop.f32.mrf.mxu0
    %358 = vmatprep.mubr.f32.mxu0 0.0
    %359 = vmatmul.mubr.f32.gmra.mxu0 %v221
    %v360 = vpop.f32.mrf.mxu0
    %v361 = vadd.f32 %v178, %v360
    %v362 = vpop.f32.mrf.mxu0
    %363 = vmatprep.mubr.f32.mxu0 0.0
    %364 = vmatmul.mubr.f32.gmra.mxu0 %v224
    %v365 = vpop.f32.mrf.mxu0
    %v366 = vadd.f32 %v178, %v365
    %v367 = vpop.f32.mrf.mxu0
    %368 = vmatprep.mubr.f32.mxu0 0.0
    %369 = vmatmul.mubr.f32.gmra.mxu0 %v227
    %v370 = vpop.f32.mrf.mxu0
    %v371 = vadd.f32 %v178, %v370
    %v372 = vpop.f32.mrf.mxu0
    %373 = vdwg.mxu0
    %v374 = vxor.u32 %v296, 2147483648
    %v375 = vxor.u32 %v301, 2147483648
    %v376 = vxor.u32 %v306, 2147483648
    %v377 = vxor.u32 %v311, 2147483648
    %v378 = vxor.u32 %v316, 2147483648
    %v379 = vxor.u32 %v321, 2147483648
    %v380 = vxor.u32 %v326, 2147483648
    %v381 = vxor.u32 %v331, 2147483648
    %v382 = vxor.u32 %v336, 2147483648
    %v383 = vxor.u32 %v341, 2147483648
    %v384 = vxor.u32 %v346, 2147483648
    %v385 = vxor.u32 %v351, 2147483648
    %v386 = vxor.u32 %v356, 2147483648
    %v387 = vxor.u32 %v361, 2147483648
    %v388 = vxor.u32 %v366, 2147483648
    %v389 = vxor.u32 %v371, 2147483648
    %v390 = vmul.f32 %v374, 1.442695
    %v391 = vpow.pop %v390
    %v392 = vmul.f32 %v375, 1.442695
    %v393 = vpow.pop %v392
    %v394 = vmul.f32 %v376, 1.442695
    %v395 = vpow.pop %v394
    %v396 = vmul.f32 %v377, 1.442695
    %v397 = vpow.pop %v396
    %v398 = vmul.f32 %v378, 1.442695
    %v399 = vpow.pop %v398
    %v400 = vmul.f32 %v379, 1.442695
    %v401 = vpow.pop %v400
    %v402 = vmul.f32 %v380, 1.442695
    %v403 = vpow.pop %v402
    %v404 = vmul.f32 %v381, 1.442695
    %v405 = vpow.pop %v404
    %v406 = vmul.f32 %v382, 1.442695
    %v407 = vpow.pop %v406
    %v408 = vmul.f32 %v383, 1.442695
    %v409 = vpow.pop %v408
    %v410 = vmul.f32 %v384, 1.442695
    %v411 = vpow.pop %v410
    %v412 = vmul.f32 %v385, 1.442695
    %v413 = vpow.pop %v412
    %v414 = vmul.f32 %v386, 1.442695
    %v415 = vpow.pop %v414
    %v416 = vmul.f32 %v387, 1.442695
    %v417 = vpow.pop %v416
    %v418 = vmul.f32 %v388, 1.442695
    %v419 = vpow.pop %v418
    %v420 = vmul.f32 %v389, 1.442695
    %v421 = vpow.pop %v420
    %v422 = vadd.f32 %v391, 1.0
    %v423 = vadd.f32 %v393, 1.0
    %v424 = vadd.f32 %v395, 1.0
    %v425 = vadd.f32 %v397, 1.0
    %v426 = vadd.f32 %v399, 1.0
    %v427 = vadd.f32 %v401, 1.0
    %v428 = vadd.f32 %v403, 1.0
    %v429 = vadd.f32 %v405, 1.0
    %v430 = vadd.f32 %v407, 1.0
    %v431 = vadd.f32 %v409, 1.0
    %v432 = vadd.f32 %v411, 1.0
    %v433 = vadd.f32 %v413, 1.0
    %v434 = vadd.f32 %v415, 1.0
    %v435 = vadd.f32 %v417, 1.0
    %v436 = vadd.f32 %v419, 1.0
    %v437 = vadd.f32 %v421, 1.0
    %v438 = vrcp.pop %v422
    %v439 = vmul.f32 1.0, %v438
    %v440 = vrcp.pop %v423
    %v441 = vmul.f32 1.0, %v440
    %v442 = vrcp.pop %v424
    %v443 = vmul.f32 1.0, %v442
    %v444 = vrcp.pop %v425
    %v445 = vmul.f32 1.0, %v444
    %v446 = vrcp.pop %v426
    %v447 = vmul.f32 1.0, %v446
    %v448 = vrcp.pop %v427
    %v449 = vmul.f32 1.0, %v448
    %v450 = vrcp.pop %v428
    %v451 = vmul.f32 1.0, %v450
    %v452 = vrcp.pop %v429
    %v453 = vmul.f32 1.0, %v452
    %v454 = vrcp.pop %v430
    %v455 = vmul.f32 1.0, %v454
    %v456 = vrcp.pop %v431
    %v457 = vmul.f32 1.0, %v456
    %v458 = vrcp.pop %v432
    %v459 = vmul.f32 1.0, %v458
    %v460 = vrcp.pop %v433
    %v461 = vmul.f32 1.0, %v460
    %v462 = vrcp.pop %v434
    %v463 = vmul.f32 1.0, %v462
    %v464 = vrcp.pop %v435
    %v465 = vmul.f32 1.0, %v464
    %v466 = vrcp.pop %v436
    %v467 = vmul.f32 1.0, %v466
    %v468 = vrcp.pop %v437
    %v469 = vmul.f32 1.0, %v468
    %v470 = vmul.f32 %v296, %v439
    %v471 = vmul.f32 %v301, %v441
    %v472 = vmul.f32 %v306, %v443
    %v473 = vmul.f32 %v311, %v445
    %v474 = vmul.f32 %v316, %v447
    %v475 = vmul.f32 %v321, %v449
    %v476 = vmul.f32 %v326, %v451
    %v477 = vmul.f32 %v331, %v453
    %v478 = vmul.f32 %v336, %v455
    %v479 = vmul.f32 %v341, %v457
    %v480 = vmul.f32 %v346, %v459
    %v481 = vmul.f32 %v351, %v461
    %v482 = vmul.f32 %v356, %v463
    %v483 = vmul.f32 %v361, %v465
    %v484 = vmul.f32 %v366, %v467
    %v485 = vmul.f32 %v371, %v469
    %v486 = vld [vmem:[%s8] sm:$0x1]
    %v488 = vlaneseq
    %v489 = vshrl.u32 %v488, 7
    %v490 = vsub.s32 0, %v489
    %v491 = vrot.slane %v486, %v490
    %v493 = vmul.f32 %v470, %v491
    %v494 = vmul.f32 %v471, %v491
    %v495 = vmul.f32 %v472, %v491
    %v496 = vmul.f32 %v473, %v491
    %v497 = vmul.f32 %v474, %v491
    %v498 = vmul.f32 %v475, %v491
    %v499 = vmul.f32 %v476, %v491
    %v500 = vmul.f32 %v477, %v491
    %v501 = vmul.f32 %v478, %v491
    %v502 = vmul.f32 %v479, %v491
    %v503 = vmul.f32 %v480, %v491
    %v504 = vmul.f32 %v481, %v491
    %v505 = vmul.f32 %v482, %v491
    %v506 = vmul.f32 %v483, %v491
    %v507 = vmul.f32 %v484, %v491
    %v508 = vmul.f32 %v485, %v491
    %v509 = vsel %vm180, %v493, 0.0
    %510 = vadd.xlane.f32.xlu0 %v509
    %v511 = vpop.xlane.xlu0 %510
    %v512 = vsel %vm180, %v494, 0.0
    %513 = vadd.xlane.f32.xlu0 %v512
    %v514 = vpop.xlane.xlu0 %513
    %v515 = vsel %vm180, %v495, 0.0
    %516 = vadd.xlane.f32.xlu0 %v515
    %v517 = vpop.xlane.xlu0 %516
    %v518 = vsel %vm180, %v496, 0.0
    %519 = vadd.xlane.f32.xlu0 %v518
    %v520 = vpop.xlane.xlu0 %519
    %v521 = vsel %vm180, %v497, 0.0
    %522 = vadd.xlane.f32.xlu0 %v521
    %v523 = vpop.xlane.xlu0 %522
    %v524 = vsel %vm180, %v498, 0.0
    %525 = vadd.xlane.f32.xlu0 %v524
    %v526 = vpop.xlane.xlu0 %525
    %v527 = vsel %vm180, %v499, 0.0
    %528 = vadd.xlane.f32.xlu0 %v527
    %v529 = vpop.xlane.xlu0 %528
    %v530 = vsel %vm180, %v500, 0.0
    %531 = vadd.xlane.f32.xlu0 %v530
    %v532 = vpop.xlane.xlu0 %531
    %v533 = vsel %vm180, %v501, 0.0
    %534 = vadd.xlane.f32.xlu0 %v533
    %v535 = vpop.xlane.xlu0 %534
    %v536 = vsel %vm180, %v502, 0.0
    %537 = vadd.xlane.f32.xlu0 %v536
    %v538 = vpop.xlane.xlu0 %537
    %v539 = vsel %vm180, %v503, 0.0
    %540 = vadd.xlane.f32.xlu0 %v539
    %v541 = vpop.xlane.xlu0 %540
    %v542 = vsel %vm180, %v504, 0.0
    %543 = vadd.xlane.f32.xlu0 %v542
    %v544 = vpop.xlane.xlu0 %543
    %v545 = vsel %vm180, %v505, 0.0
    %546 = vadd.xlane.f32.xlu0 %v545
    %v547 = vpop.xlane.xlu0 %546
    %v548 = vsel %vm180, %v506, 0.0
    %549 = vadd.xlane.f32.xlu0 %v548
    %v550 = vpop.xlane.xlu0 %549
    %v551 = vsel %vm180, %v507, 0.0
    %552 = vadd.xlane.f32.xlu0 %v551
    %v553 = vpop.xlane.xlu0 %552
    %v554 = vsel %vm180, %v508, 0.0
    %555 = vadd.xlane.f32.xlu0 %v554
    %v556 = vpop.xlane.xlu0 %555
    %v557 = vtanh.pop %v511
    %v558 = vtanh.pop %v514
    %v559 = vtanh.pop %v517
    %v560 = vtanh.pop %v520
    %v561 = vtanh.pop %v523
    %v562 = vtanh.pop %v526
    %v563 = vtanh.pop %v529
    %v564 = vtanh.pop %v532
    %v565 = vtanh.pop %v535
    %v566 = vtanh.pop %v538
    %v567 = vtanh.pop %v541
    %v568 = vtanh.pop %v544
    %v569 = vtanh.pop %v547
    %v570 = vtanh.pop %v550
    %v571 = vtanh.pop %v553
    %v572 = vtanh.pop %v556
    %v573 = vmul.f32 %v557, 10.0
    %v574 = vmul.f32 %v558, 10.0
    %v575 = vmul.f32 %v559, 10.0
    %v576 = vmul.f32 %v560, 10.0
    %v577 = vmul.f32 %v561, 10.0
    %v578 = vmul.f32 %v562, 10.0
    %v579 = vmul.f32 %v563, 10.0
    %v580 = vmul.f32 %v564, 10.0
    %v581 = vmul.f32 %v565, 10.0
    %v582 = vmul.f32 %v566, 10.0
    %v583 = vmul.f32 %v567, 10.0
    %v584 = vmul.f32 %v568, 10.0
    %v585 = vmul.f32 %v569, 10.0
    %v586 = vmul.f32 %v570, 10.0
    %v587 = vmul.f32 %v571, 10.0
    %v588 = vmul.f32 %v572, 10.0
    %v589 = vld [vmem:[%s2] sm:$0xff]
    %v590 = vld [vmem:[%s2 + $0x8] sm:$0xff]
    %v591 = vld [vmem:[%s2 + $0x10] sm:$0xff]
    %v592 = vld [vmem:[%s2 + $0x18] sm:$0xff]
    %v593 = vld [vmem:[%s2 + $0x20] sm:$0xff]
    %v594 = vld [vmem:[%s2 + $0x28] sm:$0xff]
    %v595 = vld [vmem:[%s2 + $0x30] sm:$0xff]
    %v596 = vld [vmem:[%s2 + $0x38] sm:$0xff]
    %v597 = vld [vmem:[%s2 + $0x40] sm:$0xff]
    %v598 = vld [vmem:[%s2 + $0x48] sm:$0xff]
    %v599 = vld [vmem:[%s2 + $0x50] sm:$0xff]
    %v600 = vld [vmem:[%s2 + $0x58] sm:$0xff]
    %v601 = vld [vmem:[%s2 + $0x60] sm:$0xff]
    %v602 = vld [vmem:[%s2 + $0x68] sm:$0xff]
    %v603 = vld [vmem:[%s2 + $0x70] sm:$0xff]
    %v604 = vld [vmem:[%s2 + $0x78] sm:$0xff]
    %v605 = vmul.f32 %v573, %v589
    %v606 = vmul.f32 %v574, %v590
    %v607 = vmul.f32 %v575, %v591
    %v608 = vmul.f32 %v576, %v592
    %v609 = vmul.f32 %v577, %v593
    %v610 = vmul.f32 %v578, %v594
    %v611 = vmul.f32 %v579, %v595
    %v612 = vmul.f32 %v580, %v596
    %v613 = vmul.f32 %v581, %v597
    %v614 = vmul.f32 %v582, %v598
    %v615 = vmul.f32 %v583, %v599
    %v616 = vmul.f32 %v584, %v600
    %v617 = vmul.f32 %v585, %v601
    %v618 = vmul.f32 %v586, %v602
    %v619 = vmul.f32 %v587, %v603
    %v620 = vmul.f32 %v588, %v604
    %v621 = vlaneseq
    %v622 = vand.u32 %v621, 127
    %v623 = vld [vmem:[%s3] sm:$0xff]
    %v624 = vld [vmem:[%s3 + $0x8] sm:$0xff]
    %v625 = vld [vmem:[%s3 + $0x10] sm:$0xff]
    %v626 = vld [vmem:[%s3 + $0x18] sm:$0xff]
    %v627 = vld [vmem:[%s3 + $0x20] sm:$0xff]
    %v628 = vld [vmem:[%s3 + $0x28] sm:$0xff]
    %v629 = vld [vmem:[%s3 + $0x30] sm:$0xff]
    %v630 = vld [vmem:[%s3 + $0x38] sm:$0xff]
    %v631 = vld [vmem:[%s3 + $0x40] sm:$0xff]
    %v632 = vld [vmem:[%s3 + $0x48] sm:$0xff]
    %v633 = vld [vmem:[%s3 + $0x50] sm:$0xff]
    %v634 = vld [vmem:[%s3 + $0x58] sm:$0xff]
    %v635 = vld [vmem:[%s3 + $0x60] sm:$0xff]
    %v636 = vld [vmem:[%s3 + $0x68] sm:$0xff]
    %v637 = vld [vmem:[%s3 + $0x70] sm:$0xff]
    %v638 = vld [vmem:[%s3 + $0x78] sm:$0xff]
    %639 = vset.pattern.permute.xlu0 0
    %640 = vperm.xlu0 %639, %v623
    %v641 = vpop.permute.xlu0 %640
    %642 = vset.pattern.permute.xlu0 0
    %643 = vperm.xlu0 %642, %v624
    %v644 = vpop.permute.xlu0 %643
    %645 = vset.pattern.permute.xlu0 0
    %646 = vperm.xlu0 %645, %v625
    %v647 = vpop.permute.xlu0 %646
    %648 = vset.pattern.permute.xlu0 0
    %649 = vperm.xlu0 %648, %v626
    %v650 = vpop.permute.xlu0 %649
    %651 = vset.pattern.permute.xlu0 0
    %652 = vperm.xlu0 %651, %v627
    %v653 = vpop.permute.xlu0 %652
    %654 = vset.pattern.permute.xlu0 0
    %655 = vperm.xlu0 %654, %v628
    %v656 = vpop.permute.xlu0 %655
    %657 = vset.pattern.permute.xlu0 0
    %658 = vperm.xlu0 %657, %v629
    %v659 = vpop.permute.xlu0 %658
    %660 = vset.pattern.permute.xlu0 0
    %661 = vperm.xlu0 %660, %v630
    %v662 = vpop.permute.xlu0 %661
    %663 = vset.pattern.permute.xlu0 0
    %664 = vperm.xlu0 %663, %v631
    %v665 = vpop.permute.xlu0 %664
    %666 = vset.pattern.permute.xlu0 0
    %667 = vperm.xlu0 %666, %v632
    %v668 = vpop.permute.xlu0 %667
    %669 = vset.pattern.permute.xlu0 0
    %670 = vperm.xlu0 %669, %v633
    %v671 = vpop.permute.xlu0 %670
    %672 = vset.pattern.permute.xlu0 0
    %673 = vperm.xlu0 %672, %v634
    %v674 = vpop.permute.xlu0 %673
    %675 = vset.pattern.permute.xlu0 0
    %676 = vperm.xlu0 %675, %v635
    %v677 = vpop.permute.xlu0 %676
    %678 = vset.pattern.permute.xlu0 0
    %679 = vperm.xlu0 %678, %v636
    %v680 = vpop.permute.xlu0 %679
    %681 = vset.pattern.permute.xlu0 0
    %682 = vperm.xlu0 %681, %v637
    %v683 = vpop.permute.xlu0 %682
    %684 = vset.pattern.permute.xlu0 0
    %685 = vperm.xlu0 %684, %v638
    %v686 = vpop.permute.xlu0 %685
    %vm687 = vcmp.eq.s32.totalorder %v622, %v641
    %vm688 = vcmp.eq.s32.totalorder %v622, %v644
    %vm689 = vcmp.eq.s32.totalorder %v622, %v647
    %vm690 = vcmp.eq.s32.totalorder %v622, %v650
    %vm691 = vcmp.eq.s32.totalorder %v622, %v653
    %vm692 = vcmp.eq.s32.totalorder %v622, %v656
    %vm693 = vcmp.eq.s32.totalorder %v622, %v659
    %vm694 = vcmp.eq.s32.totalorder %v622, %v662
    %vm695 = vcmp.eq.s32.totalorder %v622, %v665
    %vm696 = vcmp.eq.s32.totalorder %v622, %v668
    %vm697 = vcmp.eq.s32.totalorder %v622, %v671
    %vm698 = vcmp.eq.s32.totalorder %v622, %v674
    %vm699 = vcmp.eq.s32.totalorder %v622, %v677
    %vm700 = vcmp.eq.s32.totalorder %v622, %v680
    %vm701 = vcmp.eq.s32.totalorder %v622, %v683
    %vm702 = vcmp.eq.s32.totalorder %v622, %v686
    %v703 = vsel %vm687, 1, 0
    %v704 = vsel %vm688, 1, 0
    %v705 = vsel %vm689, 1, 0
    %v706 = vsel %vm690, 1, 0
    %v707 = vsel %vm691, 1, 0
    %v708 = vsel %vm692, 1, 0
    %v709 = vsel %vm693, 1, 0
    %v710 = vsel %vm694, 1, 0
    %v711 = vsel %vm695, 1, 0
    %v712 = vsel %vm696, 1, 0
    %v713 = vsel %vm697, 1, 0
    %v714 = vsel %vm698, 1, 0
    %v715 = vsel %vm699, 1, 0
    %v716 = vsel %vm700, 1, 0
    %v717 = vsel %vm701, 1, 0
    %v718 = vsel %vm702, 1, 0
    %v719 = vcvt.s32.f32 %v703
    %v720 = vcvt.s32.f32 %v704
    %v721 = vcvt.s32.f32 %v705
    %v722 = vcvt.s32.f32 %v706
    %v723 = vcvt.s32.f32 %v707
    %v724 = vcvt.s32.f32 %v708
    %v725 = vcvt.s32.f32 %v709
    %v726 = vcvt.s32.f32 %v710
    %v727 = vcvt.s32.f32 %v711
    %v728 = vcvt.s32.f32 %v712
    %v729 = vcvt.s32.f32 %v713
    %v730 = vcvt.s32.f32 %v714
    %v731 = vcvt.s32.f32 %v715
    %v732 = vcvt.s32.f32 %v716
    %v733 = vcvt.s32.f32 %v717
    %v734 = vcvt.s32.f32 %v718
    %v735 = vld [vmem:[#allocation2] sm:$0x7]
    %v736 = vld [vmem:[%s1] sm:$0x7]
    %738 = vset.pattern.permute.xlu0 0
    %739 = vperm.xlu0 %738, %v605
    %v740 = vpop.permute.xlu0 %739
    %743 = vset.pattern.permute.xlu0 0
    %744 = vperm.xlu0 %743, %v606
    %v745 = vpop.permute.xlu0 %744
    %748 = vset.pattern.permute.xlu0 0
    %749 = vperm.xlu0 %748, %v607
    %v750 = vpop.permute.xlu0 %749
    %753 = vset.pattern.permute.xlu0 0
    %754 = vperm.xlu0 %753, %v608
    %v755 = vpop.permute.xlu0 %754
    %758 = vset.pattern.permute.xlu0 0
    %759 = vperm.xlu0 %758, %v609
    %v760 = vpop.permute.xlu0 %759
    %763 = vset.pattern.permute.xlu0 0
    %764 = vperm.xlu0 %763, %v610
    %v765 = vpop.permute.xlu0 %764
    %768 = vset.pattern.permute.xlu0 0
    %769 = vperm.xlu0 %768, %v611
    %v770 = vpop.permute.xlu0 %769
    %773 = vset.pattern.permute.xlu0 0
    %774 = vperm.xlu0 %773, %v612
    %v775 = vpop.permute.xlu0 %774
    %778 = vset.pattern.permute.xlu0 0
    %779 = vperm.xlu0 %778, %v613
    %v780 = vpop.permute.xlu0 %779
    %783 = vset.pattern.permute.xlu0 0
    %784 = vperm.xlu0 %783, %v614
    %v785 = vpop.permute.xlu0 %784
    %788 = vset.pattern.permute.xlu0 0
    %789 = vperm.xlu0 %788, %v615
    %v790 = vpop.permute.xlu0 %789
    %793 = vset.pattern.permute.xlu0 0
    %794 = vperm.xlu0 %793, %v616
    %v795 = vpop.permute.xlu0 %794
    %798 = vset.pattern.permute.xlu0 0
    %799 = vperm.xlu0 %798, %v617
    %v800 = vpop.permute.xlu0 %799
    %803 = vset.pattern.permute.xlu0 0
    %804 = vperm.xlu0 %803, %v618
    %v805 = vpop.permute.xlu0 %804
    %808 = vset.pattern.permute.xlu0 0
    %809 = vperm.xlu0 %808, %v619
    %v810 = vpop.permute.xlu0 %809
    %813 = vset.pattern.permute.xlu0 0
    %814 = vperm.xlu0 %813, %v620
    %v815 = vpop.permute.xlu0 %814
    %v817 = vmul.f32 %v719, %v740
    %v818 = vmul.f32 %v720, %v745
    %v819 = vmul.f32 %v721, %v750
    %v820 = vmul.f32 %v722, %v755
    %v821 = vmul.f32 %v723, %v760
    %v822 = vmul.f32 %v724, %v765
    %v823 = vmul.f32 %v725, %v770
    %v824 = vmul.f32 %v726, %v775
    %v825 = vmul.f32 %v727, %v780
    %v826 = vmul.f32 %v728, %v785
    %v827 = vmul.f32 %v729, %v790
    %v828 = vmul.f32 %v730, %v795
    %v829 = vmul.f32 %v731, %v800
    %v830 = vmul.f32 %v732, %v805
    %v831 = vmul.f32 %v733, %v810
    %v832 = vmul.f32 %v734, %v815
    %833 = vmatprep.subr.mxu0 0.0
    %834 = vmatpush1.msra.mxu0 %v832
    %835 = vmatprep.subr.mxu0 0.0
    %836 = vmatpush1.msra.mxu0 %v831
    %837 = vmatprep.subr.mxu0 0.0
    %838 = vmatpush1.msra.mxu0 %v830
    %839 = vmatprep.subr.mxu0 0.0
    %840 = vmatpush1.msra.mxu0 %v829
    %841 = vmatprep.subr.mxu0 0.0
    %842 = vmatpush1.msra.mxu0 %v828
    %843 = vmatprep.subr.mxu0 0.0
    %844 = vmatpush1.msra.mxu0 %v827
    %845 = vmatprep.subr.mxu0 0.0
    %846 = vmatpush1.msra.mxu0 %v826
    %847 = vmatprep.subr.mxu0 0.0
    %848 = vmatpush1.msra.mxu0 %v825
    %849 = vmatprep.subr.mxu0 0.0
    %850 = vmatpush1.msra.mxu0 %v824
    %851 = vmatprep.subr.mxu0 0.0
    %852 = vmatpush1.msra.mxu0 %v823
    %853 = vmatprep.subr.mxu0 0.0
    %854 = vmatpush1.msra.mxu0 %v822
    %855 = vmatprep.subr.mxu0 0.0
    %856 = vmatpush1.msra.mxu0 %v821
    %857 = vmatprep.subr.mxu0 0.0
    %858 = vmatpush1.msra.mxu0 %v820
    %859 = vmatprep.subr.mxu0 0.0
    %860 = vmatpush1.msra.mxu0 %v819
    %861 = vmatprep.subr.mxu0 0.0
    %862 = vmatpush1.msra.mxu0 %v818
    %863 = vmatprep.subr.mxu0 0.0
    %864 = vmatpush1.msra.mxu0 %v817
    %865 = vmatprep.subr.mxu0 0.0
    %866 = vmatpush2.msra.mxu0 0.0
    %867 = vmatprep.subr.mxu0 0.0
    %868 = vmatpush2.msra.mxu0 0.0
    %869 = vmatprep.subr.mxu0 0.0
    %870 = vmatpush2.msra.mxu0 0.0
    %871 = vmatprep.subr.mxu0 0.0
    %872 = vmatpush2.msra.mxu0 0.0
    %873 = vmatprep.subr.mxu0 0.0
    %874 = vmatpush2.msra.mxu0 0.0
    %875 = vmatprep.subr.mxu0 0.0
    %876 = vmatpush2.msra.mxu0 0.0
    %877 = vmatprep.subr.mxu0 0.0
    %878 = vmatpush2.msra.mxu0 0.0
    %879 = vmatprep.subr.mxu0 0.0
    %880 = vmatpush2.msra.mxu0 0.0
    %881 = vmatprep.subr.mxu0 0.0
    %882 = vmatpush2.msra.mxu0 0.0
    %883 = vmatprep.subr.mxu0 0.0
    %884 = vmatpush2.msra.mxu0 0.0
    %885 = vmatprep.subr.mxu0 0.0
    %886 = vmatpush2.msra.mxu0 0.0
    %887 = vmatprep.subr.mxu0 0.0
    %888 = vmatpush2.msra.mxu0 0.0
    %889 = vmatprep.subr.mxu0 0.0
    %890 = vmatpush2.msra.mxu0 0.0
    %891 = vmatprep.subr.mxu0 0.0
    %892 = vmatpush2.msra.mxu0 0.0
    %893 = vmatprep.subr.mxu0 0.0
    %894 = vmatpush2.msra.mxu0 0.0
    %895 = vmatprep.subr.mxu0 0.0
    %896 = vmatpush2.msra.mxu0 0.0
    %897 = vmatprep.mubr.f32.mxu0 0.0
    %898 = vmatmul.mubr.f32.gmra.mxu0 %v736
    %v899 = vpop.f32.mrf.mxu0
    %v900 = vadd.f32 0.0, %v899
    %v901 = vpop.f32.mrf.mxu0
    %902 = vdwg.mxu0
    %v903 = vadd.f32 %v735, %v900
    %vm904 = vcmask 59392
    %905 = vst.msk [vmem:[#allocation2] sm:$0x7] %vm904, %v903
    // Predicated region
    $region42: #{tpu_custom_call.1} parent=1 // pred_check
      %p906 = pneg %p33
    $region43: #{tpu_custom_call.1} parent=1 // pred_check_branch
      %908 = sbr.rel (%p906) target = $region45
    $region44: #{tpu_custom_call.1} parent=1 // pred_region
      %v909 = vld [vmem:[#allocation2] sm:$0x7]
      %v910 = vrcp.pop 4.0
      %v911 = vmul.f32 %v909, %v910
      %v912 = vld [vmem:[%s4] sm:$0x7]
      %v913 = vadd.f32 %v912, %v911
      %v914 = vld [vmem:[%s5] sm:$0x1]
      %v916 = vlaneseq
      %v917 = vshrl.u32 %v916, 7
      %v918 = vsub.s32 0, %v917
      %v919 = vrot.slane %v914, %v918
      %v921 = vmul.f32 %v913, %v919
      %922 = vst.msk [vmem:[#allocation4] sm:$0x7] %vm904, %v921
    $region45: #{tpu_custom_call.1} parent=1 // pred_fallthru
      _
    // Predicated region
    $region46: #{tpu_custom_call.1} parent=1 // pred_check
      _
    $region47: #{tpu_custom_call.1} parent=1 // pred_check_branch
      %924 = sbr.rel (0) target = $region49
    $region48: #{tpu_custom_call.1} parent=1 // pred_region
      %s926 = ssub.s32 64, 64
      %927 = vsyncadd [#allocation5], %s926
      %s929 = sshll.u32 [#allocation4], 4
      %s930 = int_to_ptr.vmem [resolvable:$true] %s929
      %932 = dma.vmem_to_hbm [thread:$0]  %s930, 64, %s9, [#allocation5]
    $region49: #{tpu_custom_call.1} parent=1 // pred_fallthru
      _
    // Predicated region
    $region50: #{tpu_custom_call.1} parent=1 // pred_check
      _
    $region51: #{tpu_custom_call.1} parent=1 // pred_check_branch
      %934 = sbr.rel (0) target = $region53
    $region52: #{tpu_custom_call.1} parent=1 // pred_region
      %935 = dma.done [#allocation5], 64
    $region53: #{tpu_custom_call.1} parent=1 // pred_fallthru
      _
    %936 = vsyncpa [#allocation5], 1

</llo_original>
